<compile_context>
chip_gen: v5e
topology: v5e:2x2
jax: 0.10.0
libtpu: 0.0.40
codegen_flags: <defaults>
</compile_context>

<pallas_src>
import jax
import jax.numpy as jnp
from jax import lax
from jax.experimental import pallas as pl
from jax.experimental.pallas import tpu as pltpu


def speaker_kernel(x_ref, vt_ref, sb_ref, o_ref):
    # x: (TB, E)   vt: (E, Hp)   sb: (2, Hp) [row 0 = scale, row 1 = bias]
    x = x_ref[...].astype(jnp.float32)
    vt = vt_ref[...].astype(jnp.float32)

    # Single MXU push: canonical (M, K) x (K, N), H on lanes, no transpose.
    y = jnp.dot(x, vt, preferred_element_type=jnp.float32)          # (TB, Hp)

    # Weight-norm scale (precomputed in wrapper) fused with the bias add.
    s = sb_ref[0:1, :]                                               # (1, Hp)
    bias = sb_ref[1:2, :]                                            # (1, Hp)
    y = y * s + bias

    # Softsign: y / (1 + |y|); reciprocal routed to the EUP slot.
    o_ref[...] = (y * pl.reciprocal(1.0 + jnp.abs(y), approx=False)).astype(
        o_ref.dtype)


def speaker_forward(x, v, g, b, *, tb=256):
    """x: (B, E); v: (H, E); g: (H, 1) or (H,); b: (H,) -> (B, H) f32."""
    B, E = x.shape
    H = v.shape[0]

    # --- Parameter-only precompute (hoisted out of the kernel) -------------
    v32 = v.astype(jnp.float32)
    s = g.reshape(H).astype(jnp.float32) * lax.rsqrt(
        jnp.sum(v32 * v32, axis=1))                                  # (H,)

    # Lane-dense H padding (multiple of 128). Padded columns have zero
    # weight / scale / bias -> softsign(0) = 0; sliced off below.
    Hp = ((H + 127) // 128) * 128
    vt = jnp.zeros((E, Hp), jnp.float32).at[:, :H].set(v32.T)        # (E, Hp)
    sb = (jnp.zeros((2, Hp), jnp.float32)
          .at[0, :H].set(s)
          .at[1, :H].set(b.reshape(H).astype(jnp.float32)))          # (2, Hp)

    # --- Batch tiling -------------------------------------------------------
    if B <= tb:
        TB, Bp = B, B
        xp = x.astype(jnp.float32)
    else:
        TB = tb
        Bp = pl.cdiv(B, TB) * TB
        xp = jnp.zeros((Bp, E), jnp.float32).at[:B].set(x.astype(jnp.float32))

    out = pl.pallas_call(
        speaker_kernel,
        out_shape=jax.ShapeDtypeStruct((Bp, Hp), jnp.float32),
        grid_spec=pl.GridSpec(
            grid=(Bp // TB,),
            in_specs=[
                pl.BlockSpec((TB, E), lambda i: (i, 0)),
                pl.BlockSpec((E, Hp), lambda i: (0, 0)),   # VMEM-resident
                pl.BlockSpec((2, Hp), lambda i: (0, 0)),   # VMEM-resident
            ],
            out_specs=pl.BlockSpec((TB, Hp), lambda i: (i, 0)),
        ),
        compiler_params=pltpu.CompilerParams(
            dimension_semantics=("parallel",),
        ),
    )(xp, vt, sb)

    return out[:B, :H]


def speaker_reference(x, v, g, b):
    row_norm = jnp.sqrt(jnp.sum(v * v, axis=1, keepdims=True))
    w = v * (g.reshape(-1, 1) / row_norm)
    y = x @ w.T + b[None, :]
    return y / (1.0 + jnp.abs(y))


if __name__ == "__main__":
    key = jax.random.PRNGKey(0)
    k_x, k_v, k_g, k_b = jax.random.split(key, 4)

    B = 2                      # batch of speaker embeddings
    E = 32                     # speaker_embedding_dim
    H = 64                     # hidden_dim

    x = jax.random.normal(k_x, (B, E), dtype=jnp.float32)

    # Deterministic synthetic parameters (shapes match the torch module:
    # weight_norm splits nn.Linear.weight into direction v (H,E) and gain g (H,1)).
    v = jax.random.normal(k_v, (H, E), dtype=jnp.float32) * 0.1
    g = jax.random.uniform(k_g, (H, 1), dtype=jnp.float32, minval=0.5, maxval=1.5)
    b = jax.random.normal(k_b, (H,), dtype=jnp.float32) * 0.01

    out = speaker_forward(x, v, g, b)
    out = jax.block_until_ready(out)

    ref = speaker_reference(x, v, g, b)
    assert out.shape == (B, H)
    assert jnp.allclose(out, ref, atol=1e-5, rtol=1e-5)

    print("KERNEL_OK")
</pallas_src>

<mosaic_0001>
module attributes {stable_mosaic.version = 11 : i64} {
  func.func @speaker_kernel(%arg0: i32, %arg1: memref<2x32xf32, #tpu.memory_space<vmem>>, %arg2: memref<32x128xf32, #tpu.memory_space<vmem>>, %arg3: memref<2x128xf32, #tpu.memory_space<vmem>>, %arg4: memref<2x128xf32, #tpu.memory_space<vmem>>) attributes {dimension_semantics = [#tpu.dimension_semantics<parallel>], iteration_bounds = array<i64: 1>, scalar_prefetch = 0 : i64, scratch_operands = 0 : i64, tpu.core_type = #tpu.core_type<tc>, window_params = [{transform_indices = @transform_0, window_bounds = array<i64: 2, 32>}, {pipeline_mode = #tpu.pipeline_mode<synchronous>, transform_indices = @transform_1, window_bounds = array<i64: 32, 128>}, {pipeline_mode = #tpu.pipeline_mode<synchronous>, transform_indices = @transform_2, window_bounds = array<i64: 2, 128>}, {transform_indices = @transform_3, window_bounds = array<i64: 2, 128>}]} {
    %c0 = arith.constant 0 : index
    %c0_0 = arith.constant 0 : index
    %0 = vector.load %arg1[%c0, %c0_0] : memref<2x32xf32, #tpu.memory_space<vmem>>, vector<2x32xf32>
    %c0_1 = arith.constant 0 : index
    %c0_2 = arith.constant 0 : index
    %1 = vector.load %arg2[%c0_1, %c0_2] : memref<32x128xf32, #tpu.memory_space<vmem>>, vector<32x128xf32>
    %cst = arith.constant dense<0.000000e+00> : vector<2x128xf32>
    %2 = tpu.matmul %0, %1, %cst {dimension_numbers = #tpu.dot_dimension_numbers<[1], [0], [0], [1], [0, 0, 1, 1], [], []>} : vector<2x32xf32>, vector<32x128xf32>, vector<2x128xf32> -> vector<2x128xf32>
    %c0_3 = arith.constant 0 : index
    %c0_4 = arith.constant 0 : index
    %3 = vector.load %arg3[%c0_3, %c0_4] : memref<2x128xf32, #tpu.memory_space<vmem>>, vector<1x128xf32>
    %c1 = arith.constant 1 : index
    %c0_5 = arith.constant 0 : index
    %4 = vector.load %arg3[%c1, %c0_5] : memref<2x128xf32, #tpu.memory_space<vmem>>, vector<1x128xf32>
    %5 = vector.broadcast %3 : vector<1x128xf32> to vector<2x128xf32>
    %6 = arith.mulf %2, %5 : vector<2x128xf32>
    %7 = vector.broadcast %4 : vector<1x128xf32> to vector<2x128xf32>
    %8 = arith.addf %6, %7 : vector<2x128xf32>
    %9 = math.absf %8 : vector<2x128xf32>
    %cst_6 = arith.constant 1.000000e+00 : f32
    %10 = vector.broadcast %cst_6 : f32 to vector<2x128xf32>
    %11 = arith.addf %10, %9 : vector<2x128xf32>
    %12 = tpu.reciprocal %11 : vector<2x128xf32> -> vector<2x128xf32>
    %13 = arith.mulf %8, %12 : vector<2x128xf32>
    %c0_7 = arith.constant 0 : index
    %c0_8 = arith.constant 0 : index
    %14 = vector.load %arg4[%c0_7, %c0_8] : memref<2x128xf32, #tpu.memory_space<vmem>>, vector<2x128xf32>
    tpu.vector_store %arg4[%c0_7, %c0_8], %13 {strides = array<i32>} : memref<2x128xf32, #tpu.memory_space<vmem>>, vector<2x128xf32>,
    return
  }
  func.func @transform_0(%arg0: i32) -> (i32, i32) {
    %c0_i32 = arith.constant 0 : i32
    %c0_i32_0 = arith.constant 0 : i32
    return %arg0, %c0_i32 : i32, i32
  }
  func.func @transform_1(%arg0: i32) -> (i32, i32) {
    %c0_i32 = arith.constant 0 : i32
    %c0_i32_0 = arith.constant 0 : i32
    %c0_i32_1 = arith.constant 0 : i32
    return %c0_i32, %c0_i32_0 : i32, i32
  }
  func.func @transform_2(%arg0: i32) -> (i32, i32) {
    %c0_i32 = arith.constant 0 : i32
    %c0_i32_0 = arith.constant 0 : i32
    %c0_i32_1 = arith.constant 0 : i32
    return %c0_i32, %c0_i32_0 : i32, i32
  }
  func.func @transform_3(%arg0: i32) -> (i32, i32) {
    %c0_i32 = arith.constant 0 : i32
    %c0_i32_0 = arith.constant 0 : i32
    return %arg0, %c0_i32 : i32, i32
  }
}

</mosaic_0001>

<llo_original>
// kernel: tpu_custom_call.1
$region0: #{tpu_custom_call.1}
  #allocation0 [shape = 'u32[]', space=smem, size = 0x4, offset = 0x4, fixed_abs, tag = 'smem constant byte address 0x4 - core index']
  #allocation1 [shape = 'u32[72,128]{1,0:T(1,128)}', space=vmem, size = 0x9000, scoped, tag = 'internal scratch']
  %s0 = inlined_call_operand.hbm [shape: f32[2,32], index: 0, kind: input, shape index: {}]
  %s1 = inlined_call_operand.hbm [shape: f32[32,128], index: 1, kind: input, shape index: {}]
  %s2 = inlined_call_operand.hbm [shape: f32[2,128], index: 2, kind: input, shape index: {}]
  %s3 = inlined_call_operand.hbm [shape: f32[2,128], index: 3, kind: output, shape index: {}]
  %s4 = sld [smem:[#allocation0]]
  $region34: #{tpu_custom_call.1} parent=0
    _
  %s6 = ssub.s32 1, %s4
  %s7 = scalar_select 0, %s6, %s4
  $region1: #{tpu_custom_call.1} parent=0
    #allocation2 [shape = 'u8[1024]{0}', space=vmem, size = 0x400, scoped, tag = 'input window, operand 0, single buffered']
    #allocation3 [shape = 's32[1]{0}', space=sflag, size = 0x4, scoped, tag = 'scoped memory for tpu_custom_call.1']
    #allocation4 [shape = 's32[1]{0}', space=sflag, size = 0x4, scoped, tag = 'scoped memory for tpu_custom_call.1']
    #allocation5 [shape = 'u8[16384]{0}', space=vmem, size = 0x4000, scoped, tag = 'input window, operand 1, single buffered']
    #allocation6 [shape = 's32[1]{0}', space=sflag, size = 0x4, scoped, tag = 'scoped memory for tpu_custom_call.1']
    #allocation7 [shape = 'u8[1024]{0}', space=vmem, size = 0x400, scoped, tag = 'input window, operand 2, single buffered']
    #allocation8 [shape = 'u8[1024]{0}', space=vmem, size = 0x400, scoped, tag = 'output window, operand 0, single buffered']
    %8 = vsyncpa [#allocation3], 0
    %9 = vsyncpa [#allocation6], 0
    %10 = vsyncpa [#allocation4], 0
    // Predicated region
    $region2: #{tpu_custom_call.1} parent=1 // pred_check
      _
    $region3: #{tpu_custom_call.1} parent=1 // pred_check_branch
      %12 = sbr.rel (0) target = $region5
    $region4: #{tpu_custom_call.1} parent=1 // pred_region
      %14 = vsyncadd [#allocation3], 0
      %s16 = sshll.u32 %s0, 4
      %s17 = int_to_ptr.hbm [resolvable:$true] %s16
      %s18 = sshll.u32 [#allocation2], 4
      %s19 = int_to_ptr.vmem [resolvable:$true] %s18
      %21 = dma.hbm_to_vmem [thread:$0]  %s17, 32, %s19, [#allocation3]
    $region5: #{tpu_custom_call.1} parent=1 // pred_fallthru
      _
    // Predicated region
    $region6: #{tpu_custom_call.1} parent=1 // pred_check
      _
    $region7: #{tpu_custom_call.1} parent=1 // pred_check_branch
      %23 = sbr.rel (0) target = $region9
    $region8: #{tpu_custom_call.1} parent=1 // pred_region
      %25 = vsyncadd [#allocation6], 0
      %s26 = sshll.u32 %s1, 4
      %s27 = int_to_ptr.hbm [resolvable:$true] %s26
      %s28 = sshll.u32 [#allocation5], 4
      %s29 = int_to_ptr.vmem [resolvable:$true] %s28
      %34 = dma.hbm_to_vmem [thread:$0]  %s27, 512, %s29, [#allocation6], 128, 128, 8
    $region9: #{tpu_custom_call.1} parent=1 // pred_fallthru
      _
    // Predicated region
    $region10: #{tpu_custom_call.1} parent=1 // pred_check
      _
    $region11: #{tpu_custom_call.1} parent=1 // pred_check_branch
      %36 = sbr.rel (0) target = $region13
    $region12: #{tpu_custom_call.1} parent=1 // pred_region
      %38 = vsyncadd [#allocation6], 0
      %s40 = sshll.u32 %s2, 4
      %s41 = int_to_ptr.hbm [resolvable:$true] %s40
      %s42 = sshll.u32 [#allocation7], 4
      %s43 = int_to_ptr.vmem [resolvable:$true] %s42
      %45 = dma.hbm_to_vmem [thread:$0]  %s41, 32, %s43, [#allocation6]
    $region13: #{tpu_custom_call.1} parent=1 // pred_fallthru
      _
    // Predicated region
    $region14: #{tpu_custom_call.1} parent=1 // pred_check
      _
    $region15: #{tpu_custom_call.1} parent=1 // pred_check_branch
      %47 = sbr.rel (0) target = $region17
    $region16: #{tpu_custom_call.1} parent=1 // pred_region
      %49 = dma.done [#allocation3], 32
    $region17: #{tpu_custom_call.1} parent=1 // pred_fallthru
      _
    // Predicated region
    $region18: #{tpu_custom_call.1} parent=1 // pred_check
      _
    $region19: #{tpu_custom_call.1} parent=1 // pred_check_branch
      %51 = sbr.rel (0) target = $region21
    $region20: #{tpu_custom_call.1} parent=1 // pred_region
      %53 = dma.done [#allocation6], 512
    $region21: #{tpu_custom_call.1} parent=1 // pred_fallthru
      _
    // Predicated region
    $region22: #{tpu_custom_call.1} parent=1 // pred_check
      _
    $region23: #{tpu_custom_call.1} parent=1 // pred_check_branch
      %55 = sbr.rel (0) target = $region25
    $region24: #{tpu_custom_call.1} parent=1 // pred_region
      %57 = dma.done [#allocation6], 32
    $region25: #{tpu_custom_call.1} parent=1 // pred_fallthru
      _
    %v58 = vld [vmem:[#allocation2] sm:$0x3]
    %v59 = vld [vmem:[#allocation5] sm:$0xff]
    %v60 = vld [vmem:[#allocation5 + $0x8] sm:$0xff]
    %v61 = vld [vmem:[#allocation5 + $0x10] sm:$0xff]
    %v62 = vld [vmem:[#allocation5 + $0x18] sm:$0xff]
    %vm63 = vcmask 261120
    %v65 = vsel %vm63, %v58, 0
    %67 = vmatpush.msra.mxu0 0.0
    %68 = vmatpush.msra.mxu0 0.0
    %69 = vmatpush.msra.mxu0 0.0
    %70 = vmatpush.msra.mxu0 0.0
    %71 = vmatpush.msra.mxu0 0.0
    %72 = vmatpush.msra.mxu0 0.0
    %73 = vmatpush.msra.mxu0 0.0
    %74 = vmatpush.msra.mxu0 0.0
    %75 = vmatpush.msra.mxu0 0.0
    %76 = vmatpush.msra.mxu0 0.0
    %77 = vmatpush.msra.mxu0 0.0
    %78 = vmatpush.msra.mxu0 0.0
    %79 = vmatpush.msra.mxu0 %v62
    %80 = vmatpush.msra.mxu0 %v61
    %81 = vmatpush.msra.mxu0 %v60
    %82 = vmatpush.msra.mxu0 %v59
    %83 = vmatmul.f32.gmra.mxu0 %v65
    %v84 = vpop.f32.mrf.mxu0
    %v85 = vadd.f32 0.0, %v84
    %86 = vdwg.mxu0
    %v87 = vld [vmem:[#allocation7] sm:$0x1]
    %v88 = vld [vmem:[#allocation7 + $0x1] sm:$0x1]
    %v89 = vperm.slane %v87, 0
    %v90 = vmul.f32 %v85, %v89
    %v91 = vperm.slane %v88, 0
    %v92 = vadd.f32 %v90, %v91
    %v93 = vand.u32 2147483647, %v92
    %v94 = vadd.f32 %v93, 1.0
    %v95 = vrcp.pop %v94
    %v96 = vmul.f32 %v94, %v95
    %v97 = vsub.f32 1.0, %v96
    %v98 = vmul.f32 %v95, %v97
    %v99 = vadd.f32 %v95, %v98
    %vm100 = vweird.f32 %v94
    %vm101 = vweird.f32 %v95
    %vm102 = vmor %vm100, %vm101
    %v103 = vsel %vm102, %v95, %v99
    %v104 = vand.u32 2147483647, %v94
    %vm105 = vcmp.eq.f32.partialorder %v104, 8.507059e+37
    %v106 = vand.u32 %v94, 2147483648
    %v107 = vor.u32 1.1754944e-38, %v106
    %v108 = vsel %vm105, %v107, %v103
    %v109 = vmul.f32 %v92, %v108
    %110 = vst [vmem:[#allocation8] sm:$0x3] %v109
    // Predicated region
    $region26: #{tpu_custom_call.1} parent=1 // pred_check
      _
    $region27: #{tpu_custom_call.1} parent=1 // pred_check_branch
      %112 = sbr.rel (0) target = $region29
    $region28: #{tpu_custom_call.1} parent=1 // pred_region
      %114 = vsyncadd [#allocation4], 0
      %s116 = sshll.u32 [#allocation8], 4
      %s117 = int_to_ptr.vmem [resolvable:$true] %s116
      %s118 = sshll.u32 %s3, 4
      %s119 = int_to_ptr.hbm [resolvable:$true] %s118
      %121 = dma.vmem_to_hbm [thread:$0]  %s117, 32, %s119, [#allocation4]
    $region29: #{tpu_custom_call.1} parent=1 // pred_fallthru
      _
    // Predicated region
    $region30: #{tpu_custom_call.1} parent=1 // pred_check
      _
    $region31: #{tpu_custom_call.1} parent=1 // pred_check_branch
      %123 = sbr.rel (0) target = $region33
    $region32: #{tpu_custom_call.1} parent=1 // pred_region
      %125 = dma.done [#allocation4], 32
    $region33: #{tpu_custom_call.1} parent=1 // pred_fallthru
      _
    %126 = vsyncpa [#allocation3], 1
    %127 = vsyncpa [#allocation6], 1
    %128 = vsyncpa [#allocation4], 1

</llo_original>
